<compile_context>
chip_gen: v5e
topology: v5e:2x2
jax: 0.10.0
libtpu: 0.0.40
codegen_flags: <defaults>
</compile_context>

<pallas_src>
import functools
import math

import jax
import jax.numpy as jnp
from jax.experimental import pallas as pl
from jax.experimental.pallas import tpu as pltpu


def _fullspace_kernel(x_ref, o_ref, *, d, eps):
    """out[:, :d] = max(x, eps); out[:, d:] = max(-x, eps)."""
    x = x_ref[...]
    eps_v = jnp.asarray(eps, x.dtype)
    o_ref[:, :d] = jnp.maximum(x, eps_v)
    o_ref[:, d:] = jnp.maximum(-x, eps_v)


def full_space_map(
    x: jax.Array,
    eps: float = 1e-12,
    target_block_bytes: int = 2 << 20,
    min_grid_steps: int = 4,
) -> jax.Array:
    """Apply FullSpaceMap along the last axis of x (any leading dims)."""
    *lead, d = x.shape
    rows = math.prod(lead) if lead else 1
    x2 = x.reshape(rows, d)

    itemsize = jnp.dtype(x.dtype).itemsize
    # Sublane packing: 8 rows for 4-byte, 16 for 2-byte, 32 for 1-byte dtypes.
    pack = max(8, 32 // itemsize)

    # ~target_block_bytes of *input* per grid step (output block is 2x that).
    row_tile = max(pack, (target_block_bytes // (d * itemsize)) // pack * pack)
    # Guarantee a multi-step grid for small/mid inputs so v7x's two
    # TensorCores both get work along the "parallel" axis.
    cap = max(pack, pl.cdiv(pl.cdiv(rows, min_grid_steps), pack) * pack)
    row_tile = min(row_tile, cap)

    # Ragged tail: boundary block DMAs are clipped; no padding, no post-slice.
    grid = (pl.cdiv(rows, row_tile),)

    # Scoped VMEM sized to the double-buffered block footprint + headroom.
    in_block_bytes = row_tile * d * itemsize
    out_block_bytes = 2 * in_block_bytes
    footprint = 2 * (in_block_bytes + out_block_bytes)
    vmem_limit = int(min(max(footprint + (8 << 20), 16 << 20), 64 << 20))

    out2 = pl.pallas_call(
        functools.partial(_fullspace_kernel, d=d, eps=eps),
        out_shape=jax.ShapeDtypeStruct((rows, 2 * d), x.dtype),
        grid_spec=pltpu.PrefetchScalarGridSpec(
            num_scalar_prefetch=0,
            grid=grid,
            in_specs=[pl.BlockSpec((row_tile, d), lambda i: (i, 0))],
            out_specs=pl.BlockSpec((row_tile, 2 * d), lambda i: (i, 0)),
        ),
        compiler_params=pltpu.CompilerParams(
            dimension_semantics=("parallel",),
            vmem_limit_bytes=vmem_limit,
        ),
        cost_estimate=pl.CostEstimate(
            flops=3 * rows * d,
            transcendentals=0,
            bytes_accessed=3 * rows * d * itemsize,
        ),
    )(x2)

    return out2.reshape(*lead, 2 * d)


def _reference(x, eps):
    return jnp.maximum(
        jnp.concatenate([x, -x], axis=-1), jnp.asarray(eps, x.dtype)
    )


if __name__ == "__main__":
    key = jax.random.PRNGKey(0)
    eps = 1e-12

    # Small shapes consistent with an attention feature map: (B, H, L, D).
    B, H, L, D = 2, 4, 8, 32
    x = jax.random.normal(key, (B, H, L, D), dtype=jnp.float32)

    out = jax.block_until_ready(full_space_map(x, eps=eps))
    ref = _reference(x, eps)
    assert out.shape == (B, H, L, 2 * D)
    assert out.dtype == x.dtype
    assert jnp.allclose(out, ref), "mismatch vs reference"

    # Ragged row count (rows not a multiple of the row tile) exercises the
    # clipped boundary-block path (no pad/slice round-trip anymore).
    x2 = jax.random.normal(jax.random.PRNGKey(1), (2, 3, 7, 32), dtype=jnp.float32)
    out2 = jax.block_until_ready(full_space_map(x2, eps=eps))
    assert out2.shape == (2, 3, 7, 64)
    assert jnp.allclose(out2, _reference(x2, eps)), "mismatch vs reference (ragged)"

    print("KERNEL_OK")
</pallas_src>

<mosaic_0001>
module attributes {stable_mosaic.version = 11 : i64} {
  func.func @_fullspace_kernel(%arg0: i32, %arg1: memref<16x32xf32, #tpu.memory_space<vmem>>, %arg2: memref<16x64xf32, #tpu.memory_space<vmem>>) attributes {dimension_semantics = [#tpu.dimension_semantics<parallel>], iteration_bounds = array<i64: 4>, scalar_prefetch = 0 : i64, scratch_operands = 0 : i64, tpu.core_type = #tpu.core_type<tc>, window_params = [{transform_indices = @transform_0, window_bounds = array<i64: 16, 32>}, {transform_indices = @transform_1, window_bounds = array<i64: 16, 64>}]} {
    %c0 = arith.constant 0 : index
    %c0_0 = arith.constant 0 : index
    %0 = vector.load %arg1[%c0, %c0_0] : memref<16x32xf32, #tpu.memory_space<vmem>>, vector<16x32xf32>
    %cst = arith.constant 9.99999996E-13 : f32
    %1 = vector.broadcast %cst : f32 to vector<16x32xf32>
    %2 = arith.maximumf %0, %1 : vector<16x32xf32>
    %c0_1 = arith.constant 0 : index
    %c0_2 = arith.constant 0 : index
    %3 = vector.load %arg2[%c0_1, %c0_2] : memref<16x64xf32, #tpu.memory_space<vmem>>, vector<16x32xf32>
    tpu.vector_store %arg2[%c0_1, %c0_2], %2 {strides = array<i32>} : memref<16x64xf32, #tpu.memory_space<vmem>>, vector<16x32xf32>,
    %cst_3 = arith.constant 0.000000e+00 : f32
    %4 = vector.broadcast %cst_3 : f32 to vector<16x32xf32>
    %5 = arith.subf %4, %0 : vector<16x32xf32>
    %cst_4 = arith.constant 9.99999996E-13 : f32
    %6 = vector.broadcast %cst_4 : f32 to vector<16x32xf32>
    %7 = arith.maximumf %5, %6 : vector<16x32xf32>
    %c0_5 = arith.constant 0 : index
    %c32 = arith.constant 32 : index
    %8 = vector.load %arg2[%c0_5, %c32] : memref<16x64xf32, #tpu.memory_space<vmem>>, vector<16x32xf32>
    tpu.vector_store %arg2[%c0_5, %c32], %7 {strides = array<i32>} : memref<16x64xf32, #tpu.memory_space<vmem>>, vector<16x32xf32>,
    return
  }
  func.func @transform_0(%arg0: i32) -> (i32, i32) {
    %c0_i32 = arith.constant 0 : i32
    %c0_i32_0 = arith.constant 0 : i32
    return %arg0, %c0_i32 : i32, i32
  }
  func.func @transform_1(%arg0: i32) -> (i32, i32) {
    %c0_i32 = arith.constant 0 : i32
    %c0_i32_0 = arith.constant 0 : i32
    return %arg0, %c0_i32 : i32, i32
  }
}

</mosaic_0001>

<llo_original>
// kernel: tpu_custom_call.1
$region0: #{tpu_custom_call.1}
  #allocation0 [shape = 'u32[]', space=smem, size = 0x4, offset = 0x4, fixed_abs, tag = 'smem constant byte address 0x4 - core index']
  #allocation1 [shape = 'u32[72,128]{1,0:T(1,128)}', space=vmem, size = 0x9000, scoped, tag = 'internal scratch']
  %s0 = inlined_call_operand.vmem [shape: f32[64,32], index: 0, kind: input, shape index: {}]
  %s1 = inlined_call_operand.hbm [shape: f32[64,64], index: 1, kind: output, shape index: {}]
  %s2 = sld [smem:[#allocation0]]
  $region37: #{tpu_custom_call.1} parent=0
    _
  %s4 = ssub.s32 1, %s2
  %s5 = scalar_select 0, %s4, %s2
  $region1: #{tpu_custom_call.1} parent=0
    #allocation2 [shape = 'u8[16384]{0}', space=vmem, size = 0x4000, scoped, tag = 'output window, operand 0']
    #allocation3 [shape = 's32[2]{0}', space=sflag, size = 0x8, scoped, tag = 'scoped memory for tpu_custom_call.1']
    %6 = vsyncpa [#allocation3], 0
    %s7 = scalar_lea.sflag [#allocation3], 1
    %8 = vsyncpa %s7, 0
    loop: start=0, step=1, limit=6
    $region2: #{tpu_custom_call.1} parent=1 // loop_pre_header
      _
    $region3: #{tpu_custom_call.1} parent=1 // loop_header
      %s10 = sphi 0, %s14
      %p11 = scmp.ge.s32.totalorder %s10, 6
      %s20 = sphi 0, %s22
      %s23 = sphi 0, %s20
      %s24 = sphi 0, %s23
      %s40 = sphi 0, %s24
      %s46 = sphi 0, %s48
      %s49 = sphi 0, %s46
      %s50 = sphi 0, %s49
      %s66 = sphi 0, %s50
    $region4: #{tpu_custom_call.1} parent=1 // loop_header_branch
      %13 = sbr.rel (%p11) target = $region8
    $region5: #{tpu_custom_call.1} parent=1 // loop_body
      %s15 = ssub.s32 %s10, 1
      %s16 = ssub.s32 %s10, 2
      %s17 = sadd.s32 %s10, 1
      %s18 = ssub.s32 %s10, %s17
      %p19 = scmp.eq.s32.totalorder %s18, 0
      %s21 = sadd.s32 %s20, 1
      %s22 = scalar_select %p19, %s20, %s21
      %p25 = pneg %p19
      %p26 = scmp.eq.s32.totalorder %s10, 3
      %p27 = por %p25, %p26
      %p28 = scmp.ne.s32.totalorder %s20, %s23
      %p29 = scmp.eq.s32.totalorder %s10, 0
      %p30 = por %p28, %p29
      %p31 = scmp.ne.s32.totalorder %s20, %s23
      %p32 = scmp.eq.s32.totalorder %s15, 3
      %p33 = por %p31, %p32
      %p34 = scmp.ne.s32.totalorder %s23, %s24
      %p35 = scmp.eq.s32.totalorder %s15, 0
      %p36 = por %p34, %p35
      %p37 = scmp.ne.s32.totalorder %s23, %s24
      %p38 = scmp.eq.s32.totalorder %s16, 3
      %p39 = por %p37, %p38
      %p41 = scmp.ne.s32.totalorder %s24, %s40
      %p42 = scmp.eq.s32.totalorder %s16, 0
      %p43 = por %p41, %p42
      %s44 = ssub.s32 %s10, %s17
      %p45 = scmp.eq.s32.totalorder %s44, 0
      %s47 = sadd.s32 %s46, 1
      %s48 = scalar_select %p45, %s46, %s47
      %p51 = pneg %p45
      %p52 = scmp.eq.s32.totalorder %s10, 3
      %p53 = por %p51, %p52
      %p54 = scmp.ne.s32.totalorder %s46, %s49
      %p55 = scmp.eq.s32.totalorder %s10, 0
      %p56 = por %p54, %p55
      %p57 = scmp.ne.s32.totalorder %s46, %s49
      %p58 = scmp.eq.s32.totalorder %s15, 3
      %p59 = por %p57, %p58
      %p60 = scmp.ne.s32.totalorder %s49, %s50
      %p61 = scmp.eq.s32.totalorder %s15, 0
      %p62 = por %p60, %p61
      %p63 = scmp.ne.s32.totalorder %s49, %s50
      %p64 = scmp.eq.s32.totalorder %s16, 3
      %p65 = por %p63, %p64
      %p67 = scmp.ne.s32.totalorder %s50, %s66
      %p68 = scmp.eq.s32.totalorder %s16, 0
      %p69 = por %p67, %p68
      %p70 = scmp.le.s32.totalorder 1, %s10
      %p71 = scmp.lt.s32.totalorder %s10, 5
      %p72 = pnand %p70, %p71
      %p73 = pneg %p72
      // Predicated region
      $region9: #{tpu_custom_call.1} parent=5 // pred_check
        _
      $region10: #{tpu_custom_call.1} parent=5 // pred_check_branch
        %75 = sbr.rel (%p72) target = $region12
      $region11: #{tpu_custom_call.1} parent=5 // pred_region
        %s76 = ssub.s32 %s10, 1
      $region12: #{tpu_custom_call.1} parent=5 // pred_fallthru
        _
      %p77 = scmp.lt.s32.totalorder %s10, 4
      // Predicated region
      $region13: #{tpu_custom_call.1} parent=5 // pred_check
        %p78 = pneg %p77
      $region14: #{tpu_custom_call.1} parent=5 // pred_check_branch
        %80 = sbr.rel (%p78) target = $region16
      $region15: #{tpu_custom_call.1} parent=5 // pred_region
        // Predicated region
        $region17: #{tpu_custom_call.1} parent=15 // pred_check
          %p81 = pneg %p30
        $region18: #{tpu_custom_call.1} parent=15 // pred_check_branch
          %83 = sbr.rel (%p81) target = $region20
        $region19: #{tpu_custom_call.1} parent=15 // pred_region
          %s84 = smul.u32 2, %s10
          %p85 = scmp.lt.s32.totalorder %s84, 7
          %s86 = scalar_select %p85, %s84, 7
          %s87 = smul.addr %s86, 8
          %s88 = scalar_lea.vmem %s0, %s87
          %s89 = smul.u32 2, %s10
        $region20: #{tpu_custom_call.1} parent=15 // pred_fallthru
          _
      $region16: #{tpu_custom_call.1} parent=5 // pred_fallthru
        _
      %p90 = scmp.le.s32.totalorder 1, %s10
      %p91 = scmp.lt.s32.totalorder %s10, 5
      %p92 = pnand %p90, %p91
      %p93 = pneg %p92
      // Predicated region
      $region21: #{tpu_custom_call.1} parent=5 // pred_check
        _
      $region22: #{tpu_custom_call.1} parent=5 // pred_check_branch
        %95 = sbr.rel (%p92) target = $region24
      $region23: #{tpu_custom_call.1} parent=5 // pred_region
        %s96 = ssub.s32 %s10, 1
        %s97 = smul.u32 2, %s15
        %p98 = scmp.lt.s32.totalorder %s97, 7
        %s99 = scalar_select %p98, %s97, 7
        %s100 = smul.addr %s99, 8
        %s101 = scalar_lea.vmem %s0, %s100
        %p102 = pneg %p36
        %p103 = pneg %p33
        %p104 = pneg %p62
        %p105 = pneg %p59
        %s106 = sand.u32 %s49, 1
        %s107 = scalar_lea.sflag [#allocation3], %s106
        %s108 = sand.u32 %s49, 1
        %s109 = smul.addr %s108, 16
        %s110 = scalar_lea.vmem [#allocation2], %s109
        %s111 = smul.u32 2, %s15
        %p112 = scmp.lt.s32.totalorder %s111, 7
        %s113 = scalar_select %p112, %s111, 7
        %s114 = smul.addr %s113, 8
        %s115 = scalar_lea.vmem %s0, %s114
        %s116 = smul.u32 2, %s15
        %s117 = smul.u32 2, %s15
        %v118 = vld [vmem:[%s115] sm:$0xff]
        %v119 = vld [vmem:[%s115 + $0x8] sm:$0xff]
        %v120 = vmax.f32 %v118, 1e-12
        %v121 = vmax.f32 %v119, 1e-12
        %vm122 = vcmask 261120
        %123 = vst.msk [vmem:[%s110] sm:$0xff] %vm122, %v120
        %124 = vst.msk [vmem:[%s110 + $0x8] sm:$0xff] %vm122, %v121
        %v125 = vsub.f32 0.0, %v118
        %v126 = vsub.f32 0.0, %v119
        %v127 = vmax.f32 %v125, 1e-12
        %v128 = vmax.f32 %v126, 1e-12
        %131 = vrot.lane.b32.xlu0 %v127, 32
        %v132 = vpop.permute.xlu0 %131
        %133 = vrot.lane.b32.xlu0 %v128, 32
        %v134 = vpop.permute.xlu0 %133
        %vm137 = vcmask 523520
        %138 = vst.msk [vmem:[%s110] sm:$0xff] %vm137, %v132
        %139 = vst.msk [vmem:[%s110 + $0x8] sm:$0xff] %vm137, %v134
        %s140 = sand.u32 %s49, 1
        %s141 = scalar_lea.sflag [#allocation3], %s140
        %s142 = sand.u32 %s49, 1
        %s143 = smul.addr %s142, 16
        %s144 = scalar_lea.vmem [#allocation2], %s143
        // Predicated region
        $region25: #{tpu_custom_call.1} parent=23 // pred_check
          %p145 = pneg %p59
        $region26: #{tpu_custom_call.1} parent=23 // pred_check_branch
          %147 = sbr.rel (%p145) target = $region28
        $region27: #{tpu_custom_call.1} parent=23 // pred_region
          %s148 = smul.u32 2, %s15
          %150 = vsyncadd %s141, 0
          %s151 = smul.addr %s148, 8
          %s152 = scalar_lea.hbm %s1, %s151
          %s153 = sshll.u32 %s144, 4
          %s154 = int_to_ptr.vmem [resolvable:$true] %s153
          %s155 = sshll.u32 %s152, 4
          %s156 = int_to_ptr.hbm [resolvable:$true] %s155
          %161 = dma.vmem_to_hbm [thread:$0]  %s154, 256, %s156, %s141, 128, 128, 8
        $region28: #{tpu_custom_call.1} parent=23 // pred_fallthru
          _
      $region24: #{tpu_custom_call.1} parent=5 // pred_fallthru
        _
      %p162 = scmp.le.s32.totalorder 2, %s10
      // Predicated region
      $region29: #{tpu_custom_call.1} parent=5 // pred_check
        %p163 = pneg %p162
      $region30: #{tpu_custom_call.1} parent=5 // pred_check_branch
        %165 = sbr.rel (%p163) target = $region32
      $region31: #{tpu_custom_call.1} parent=5 // pred_region
        %s166 = ssub.s32 %s10, 2
        // Predicated region
        $region33: #{tpu_custom_call.1} parent=31 // pred_check
          %p167 = pneg %p65
        $region34: #{tpu_custom_call.1} parent=31 // pred_check_branch
          %169 = sbr.rel (%p167) target = $region36
        $region35: #{tpu_custom_call.1} parent=31 // pred_region
          %s170 = sand.u32 %s50, 1
          %s171 = scalar_lea.sflag [#allocation3], %s170
          %s172 = sand.u32 %s50, 1
          %s173 = smul.addr %s172, 16
          %s174 = scalar_lea.vmem [#allocation2], %s173
          %176 = dma.done %s171, 256
        $region36: #{tpu_custom_call.1} parent=31 // pred_fallthru
          _
      $region32: #{tpu_custom_call.1} parent=5 // pred_fallthru
        _
    $region6: #{tpu_custom_call.1} parent=1 // loop_footer
      %s14 = sadd.s32 1, %s10
    $region7: #{tpu_custom_call.1} parent=1 // loop_footer_branch
      %9 = sbr.rel target = $region3
    $region8: #{tpu_custom_call.1} parent=1 // loop_exit
      _
    %177 = vsyncpa [#allocation3], 1
    %s178 = scalar_lea.sflag [#allocation3], 1
    %179 = vsyncpa %s178, 1

</llo_original>
